<compile_context>
chip_gen: v7x
topology: tpu7x:2x2x1
jax: 0.10.0
libtpu: 0.0.40
codegen_flags: <defaults>
</compile_context>

<pallas_src>
import numpy as np
import jax
import jax.numpy as jnp
from jax.experimental import pallas as pl
from jax.experimental.pallas import tpu as pltpu


_TARGET_STEP_BYTES = 2 * 1024 * 1024     # aim for >= ~2 MiB of input per grid step
_MAX_BATCH_FOLD = 16                     # cap static unroll over folded batch elems


def _vmem_budgets():
    """(tile_budget_bytes, scoped_vmem_limit_bytes) for this TPU generation."""
    vmem = None
    try:
        info = pltpu.get_tpu_info()
        vmem = getattr(info, "vmem_capacity_bytes", None)
    except Exception:
        vmem = None
    if vmem is None:
        vmem = 64 * 1024 * 1024          # conservative fallback: v7x-sized VMEM
    if vmem >= 100 * 1024 * 1024:        # v5e / v6e: 128 MiB physical VMEM
        return 40 * 1024 * 1024, 80 * 1024 * 1024
    # v7x: 64 MiB physical / 32 MiB scoped default
    return 16 * 1024 * 1024, 32 * 1024 * 1024


def _round_up(x, m):
    return -(-x // m) * m


def _pick_tiling(N, C, S, itemsize, tile_budget):
    """Choose (batch_fold bt, spatial tile ts)."""
    # Sublane packing: 8 rows/vreg for 4B dtypes, 16 for 2B, 32 for 1B.
    sub = 8 * max(1, 4 // itemsize)
    c_pad = _round_up(C, sub)
    # Double-buffered in + out VMEM bytes per (batch elem, lane):
    # 2 pipeline buffers * 2 tensors * padded channels * itemsize.
    bytes_per_lane = 4 * c_pad * itemsize

    cap_lanes = max(128, (tile_budget // bytes_per_lane) // 128 * 128)

    if S > cap_lanes:
        # Big images: tile the spatial axis with the largest lane-dense tile
        # that fits the budget; Pallas clips the ragged last block (cheaper
        # than shrinking every block to an exact divisor).
        return 1, cap_lanes

    # Whole spatial plane per block -> one contiguous DMA per batch element.
    ts = S
    per_batch_vmem = bytes_per_lane * _round_up(S, 128)
    per_batch_hbm = C * S * itemsize
    bt_max = min(
        N,
        _MAX_BATCH_FOLD,
        max(1, tile_budget // per_batch_vmem),
        max(1, _TARGET_STEP_BYTES // max(per_batch_hbm, 1)),
    )
    if N >= 4:
        # Keep >= ~4 grid steps so input DMA of step i+1 overlaps writeback of
        # step i-1 (matters most on the 2-TensorCore v7x part).
        bt_max = max(1, min(bt_max, N // 4))
    bt = 1
    for d in range(1, bt_max + 1):       # largest divisor of N <= bt_max
        if N % d == 0:
            bt = d
    return bt, ts


def _make_kernel(bt):
    def kernel(x_ref, w_ref, o_ref):
        # x_ref: (bt, C, ts)  activations, spatial lane-dense.
        # w_ref: (C, C)       weight (output-channel major, as in PyTorch).
        # o_ref: (bt, C, ts)  output.
        w = w_ref[...]
        for b in range(bt):              # small static unroll over folded batch
            y = jnp.dot(w, x_ref[b], preferred_element_type=jnp.float32)
            o_ref[b] = y.astype(o_ref.dtype)
    return kernel


def invertible_conv1x1_forward(x_nchw, weight):
    """z[n,o,h,w] = sum_i W[o,i] * x[n,i,h,w]  (== F.conv2d(x, W.view(C,C,1,1)))."""
    N, C, H, W = x_nchw.shape
    assert weight.shape == (C, C)

    S = H * W
    x3 = x_nchw.reshape(N, C, S)         # free reshape; stays NCHW-contiguous
    itemsize = jnp.dtype(x3.dtype).itemsize

    tile_budget, vmem_limit = _vmem_budgets()
    bt, ts = _pick_tiling(N, C, S, itemsize, tile_budget)
    grid = (N // bt, pl.cdiv(S, ts))

    cost = pl.CostEstimate(
        flops=2 * N * C * C * S,
        transcendentals=0,
        bytes_accessed=2 * N * C * S * itemsize + C * C * weight.dtype.itemsize,
    )

    z3 = pl.pallas_call(
        _make_kernel(bt),
        out_shape=jax.ShapeDtypeStruct((N, C, S), x3.dtype),
        grid=grid,
        in_specs=[
            pl.BlockSpec((bt, C, ts), lambda n, s: (n, 0, s)),
            pl.BlockSpec((C, C), lambda n, s: (0, 0)),   # resident weight
        ],
        out_specs=pl.BlockSpec((bt, C, ts), lambda n, s: (n, 0, s)),
        compiler_params=pltpu.CompilerParams(
            dimension_semantics=("parallel", "parallel"),
            vmem_limit_bytes=vmem_limit,
        ),
        cost_estimate=cost,
    )(x3, weight)

    return z3.reshape(N, C, H, W)


def invertible_conv1x1_dlogdet(weight):
    # Mirrors the module exactly: the non-LU get_weight() hard-codes
    # pixels = 3 * 80 * 80 (it does NOT use the input's H*W).  forward() with
    # logdet=None never uses this value; provided for completeness.
    # TODO(synk): if upstream is fixed to use the input's H*W, pass pixels in.
    pixels = 3 * 80 * 80
    return jnp.linalg.slogdet(weight)[1] * pixels


def make_weight(num_channels, seed=0):
    # Deterministic orthogonal init, mirroring np.linalg.qr(np.random.randn(C, C))[0]
    rng = np.random.RandomState(seed)
    w_init = np.linalg.qr(rng.randn(num_channels, num_channels))[0].astype(np.float32)
    return jnp.asarray(w_init)


if __name__ == "__main__":
    N, C, H, W = 2, 4, 16, 16
    key = jax.random.PRNGKey(0)
    x = jax.random.normal(key, (N, C, H, W), dtype=jnp.float32)
    weight = make_weight(C, seed=0)

    z = invertible_conv1x1_forward(x, weight)
    z = jax.block_until_ready(z)

    # Reference: same math as F.conv2d with a (C, C, 1, 1) kernel.
    z_ref = jnp.einsum("oi,nihw->nohw", weight, x)
    np.testing.assert_allclose(np.asarray(z), np.asarray(z_ref), rtol=1e-5, atol=1e-5)

    _ = jax.block_until_ready(invertible_conv1x1_dlogdet(weight))

    print("KERNEL_OK")
</pallas_src>

<mosaic_0001>
module attributes {stable_mosaic.version = 11 : i64} {
  func.func @kernel(%arg0: i32, %arg1: i32, %arg2: memref<2x4x256xf32, #tpu.memory_space<vmem>>, %arg3: memref<4x4xf32, #tpu.memory_space<vmem>>, %arg4: memref<2x4x256xf32, #tpu.memory_space<vmem>>) attributes {dimension_semantics = [#tpu.dimension_semantics<parallel>, #tpu.dimension_semantics<parallel>], iteration_bounds = array<i64: 1, 1>, scalar_prefetch = 0 : i64, scratch_operands = 0 : i64, tpu.core_type = #tpu.core_type<tc>, window_params = [{transform_indices = @transform_0, window_bounds = array<i64: 2, 4, 256>}, {pipeline_mode = #tpu.pipeline_mode<synchronous>, transform_indices = @transform_1, window_bounds = array<i64: 4, 4>}, {transform_indices = @transform_2, window_bounds = array<i64: 2, 4, 256>}]} {
    %c0 = arith.constant 0 : index
    %c0_0 = arith.constant 0 : index
    %0 = vector.load %arg3[%c0, %c0_0] : memref<4x4xf32, #tpu.memory_space<vmem>>, vector<4x4xf32>
    %c0_1 = arith.constant 0 : index
    %c0_2 = arith.constant 0 : index
    %c0_3 = arith.constant 0 : index
    %1 = vector.load %arg2[%c0_1, %c0_2, %c0_3] : memref<2x4x256xf32, #tpu.memory_space<vmem>>, vector<1x4x256xf32>
    %2 = vector.shape_cast %1 : vector<1x4x256xf32> to vector<4x256xf32>
    %cst = arith.constant dense<0.000000e+00> : vector<4x256xf32>
    %3 = tpu.matmul %0, %2, %cst {dimension_numbers = #tpu.dot_dimension_numbers<[1], [0], [0], [1], [0, 0, 1, 1], [], []>} : vector<4x4xf32>, vector<4x256xf32>, vector<4x256xf32> -> vector<4x256xf32>
    %c0_4 = arith.constant 0 : index
    %c0_5 = arith.constant 0 : index
    %c0_6 = arith.constant 0 : index
    %4 = vector.load %arg4[%c0_4, %c0_5, %c0_6] : memref<2x4x256xf32, #tpu.memory_space<vmem>>, vector<1x4x256xf32>
    %5 = vector.shape_cast %4 : vector<1x4x256xf32> to vector<4x256xf32>
    %6 = vector.shape_cast %3 : vector<4x256xf32> to vector<1x4x256xf32>
    tpu.vector_store %arg4[%c0_4, %c0_5, %c0_6], %6 {strides = array<i32>} : memref<2x4x256xf32, #tpu.memory_space<vmem>>, vector<1x4x256xf32>,
    %c1 = arith.constant 1 : index
    %c0_7 = arith.constant 0 : index
    %c0_8 = arith.constant 0 : index
    %7 = vector.load %arg2[%c1, %c0_7, %c0_8] : memref<2x4x256xf32, #tpu.memory_space<vmem>>, vector<1x4x256xf32>
    %8 = vector.shape_cast %7 : vector<1x4x256xf32> to vector<4x256xf32>
    %cst_9 = arith.constant dense<0.000000e+00> : vector<4x256xf32>
    %9 = tpu.matmul %0, %8, %cst_9 {dimension_numbers = #tpu.dot_dimension_numbers<[1], [0], [0], [1], [0, 0, 1, 1], [], []>} : vector<4x4xf32>, vector<4x256xf32>, vector<4x256xf32> -> vector<4x256xf32>
    %c1_10 = arith.constant 1 : index
    %c0_11 = arith.constant 0 : index
    %c0_12 = arith.constant 0 : index
    %10 = vector.load %arg4[%c1_10, %c0_11, %c0_12] : memref<2x4x256xf32, #tpu.memory_space<vmem>>, vector<1x4x256xf32>
    %11 = vector.shape_cast %10 : vector<1x4x256xf32> to vector<4x256xf32>
    %12 = vector.shape_cast %9 : vector<4x256xf32> to vector<1x4x256xf32>
    tpu.vector_store %arg4[%c1_10, %c0_11, %c0_12], %12 {strides = array<i32>} : memref<2x4x256xf32, #tpu.memory_space<vmem>>, vector<1x4x256xf32>,
    return
  }
  func.func @transform_0(%arg0: i32, %arg1: i32) -> (i32, i32, i32) {
    %c0_i32 = arith.constant 0 : i32
    %c0_i32_0 = arith.constant 0 : i32
    return %arg0, %c0_i32, %arg1 : i32, i32, i32
  }
  func.func @transform_1(%arg0: i32, %arg1: i32) -> (i32, i32) {
    %c0_i32 = arith.constant 0 : i32
    %c0_i32_0 = arith.constant 0 : i32
    %c0_i32_1 = arith.constant 0 : i32
    return %c0_i32, %c0_i32_0 : i32, i32
  }
  func.func @transform_2(%arg0: i32, %arg1: i32) -> (i32, i32, i32) {
    %c0_i32 = arith.constant 0 : i32
    %c0_i32_0 = arith.constant 0 : i32
    return %arg0, %c0_i32, %arg1 : i32, i32, i32
  }
}

</mosaic_0001>

<llo_original>
// kernel: tpu_custom_call.1
$region0: #{tpu_custom_call.1}
  #allocation0 [shape = 'u32[]', space=smem, size = 0x4, offset = 0x4, fixed_abs, tag = 'smem constant byte address 0x4 - core index']
  #allocation1 [shape = 'u32[144,128]{1,0:T(1,128)}', space=vmem, size = 0x12000, scoped, tag = 'internal scratch']
  %s0 = inlined_call_operand.hbm [shape: f32[2,4,256], index: 0, kind: input, shape index: {}]
  %s1 = inlined_call_operand.hbm [shape: f32[4,4], index: 1, kind: input, shape index: {}]
  %s2 = inlined_call_operand.hbm [shape: f32[2,4,256], index: 2, kind: output, shape index: {}]
  %s3 = sld [smem:[#allocation0]]
  $region26: #{tpu_custom_call.1} parent=0
    _
  %s5 = ssub.s32 1, %s3
  %s6 = scalar_select 0, %s5, %s3
  $region1: #{tpu_custom_call.1} parent=0
    #allocation2 [shape = 'u8[8192]{0}', space=vmem, size = 0x2000, scoped, tag = 'input window, operand 0, single buffered']
    #allocation3 [shape = 's32[1]{0}', space=sflag, size = 0x4, scoped, tag = 'scoped memory for tpu_custom_call.1']
    #allocation4 [shape = 's32[1]{0}', space=sflag, size = 0x4, scoped, tag = 'scoped memory for tpu_custom_call.1']
    #allocation5 [shape = 'u8[2048]{0}', space=vmem, size = 0x800, scoped, tag = 'input window, operand 1, single buffered']
    #allocation6 [shape = 's32[1]{0}', space=sflag, size = 0x4, scoped, tag = 'scoped memory for tpu_custom_call.1']
    #allocation7 [shape = 'u8[8192]{0}', space=vmem, size = 0x2000, scoped, tag = 'output window, operand 0, single buffered']
    %7 = vsyncpa [#allocation3], 0
    %8 = vsyncpa [#allocation6], 0
    %9 = vsyncpa [#allocation4], 0
    // Predicated region
    $region2: #{tpu_custom_call.1} parent=1 // pred_check
      _
    $region3: #{tpu_custom_call.1} parent=1 // pred_check_branch
      %11 = sbr.rel (0) target = $region5
    $region4: #{tpu_custom_call.1} parent=1 // pred_region
      %s13 = ssub.s32 256, 256
      %14 = vsyncadd [#allocation3], %s13
      %s15 = sshll.u32 [#allocation2], 4
      %s16 = int_to_ptr.vmem [resolvable:$true] %s15
      %21 = dma.hbm_to_vmem [thread:$0]  %s0, 256, %s16, [#allocation3], 128, 128, 8
    $region5: #{tpu_custom_call.1} parent=1 // pred_fallthru
      _
    // Predicated region
    $region6: #{tpu_custom_call.1} parent=1 // pred_check
      _
    $region7: #{tpu_custom_call.1} parent=1 // pred_check_branch
      %23 = sbr.rel (0) target = $region9
    $region8: #{tpu_custom_call.1} parent=1 // pred_region
      %s25 = ssub.s32 64, 64
      %26 = vsyncadd [#allocation6], %s25
      %s28 = sshll.u32 [#allocation5], 4
      %s29 = int_to_ptr.vmem [resolvable:$true] %s28
      %31 = dma.hbm_to_vmem [thread:$0]  %s1, 64, %s29, [#allocation6]
    $region9: #{tpu_custom_call.1} parent=1 // pred_fallthru
      _
    // Predicated region
    $region10: #{tpu_custom_call.1} parent=1 // pred_check
      _
    $region11: #{tpu_custom_call.1} parent=1 // pred_check_branch
      %33 = sbr.rel (0) target = $region13
    $region12: #{tpu_custom_call.1} parent=1 // pred_region
      %34 = dma.done [#allocation3], 256
    $region13: #{tpu_custom_call.1} parent=1 // pred_fallthru
      _
    // Predicated region
    $region14: #{tpu_custom_call.1} parent=1 // pred_check
      _
    $region15: #{tpu_custom_call.1} parent=1 // pred_check_branch
      %36 = sbr.rel (0) target = $region17
    $region16: #{tpu_custom_call.1} parent=1 // pred_region
      %37 = dma.done [#allocation6], 64
    $region17: #{tpu_custom_call.1} parent=1 // pred_fallthru
      _
    %v38 = vld [vmem:[#allocation5] sm:$0xf]
    %v39 = vld [vmem:[#allocation2] sm:$0xff]
    %v41 = vcombine.high %v39, %v39
    %vm42 = vcmask 31744
    %v44 = vsel %vm42, %v38, 0
    %vm46 = vcmask 1043456
    %v47 = vsel %vm46, %v39, 0
    %v49 = vsel %vm46, %v41, 0
    %51 = vmatprep.subr.mxu0 %v49
    %52 = vmatpush1.msra.mxu0 %v47
    %53 = vmatprep.subr.mxu0 0.0
    %54 = vmatpush1.msra.mxu0 0.0
    %55 = vmatprep.subr.mxu0 0.0
    %56 = vmatpush1.msra.mxu0 0.0
    %57 = vmatprep.subr.mxu0 0.0
    %58 = vmatpush1.msra.mxu0 0.0
    %59 = vmatprep.subr.mxu0 0.0
    %60 = vmatpush1.msra.mxu0 0.0
    %61 = vmatprep.subr.mxu0 0.0
    %62 = vmatpush1.msra.mxu0 0.0
    %63 = vmatprep.subr.mxu0 0.0
    %64 = vmatpush1.msra.mxu0 0.0
    %65 = vmatprep.subr.mxu0 0.0
    %66 = vmatpush1.msra.mxu0 0.0
    %67 = vmatprep.subr.mxu0 0.0
    %68 = vmatpush1.msra.mxu0 0.0
    %69 = vmatprep.subr.mxu0 0.0
    %70 = vmatpush1.msra.mxu0 0.0
    %71 = vmatprep.subr.mxu0 0.0
    %72 = vmatpush1.msra.mxu0 0.0
    %73 = vmatprep.subr.mxu0 0.0
    %74 = vmatpush1.msra.mxu0 0.0
    %75 = vmatprep.subr.mxu0 0.0
    %76 = vmatpush1.msra.mxu0 0.0
    %77 = vmatprep.subr.mxu0 0.0
    %78 = vmatpush1.msra.mxu0 0.0
    %79 = vmatprep.subr.mxu0 0.0
    %80 = vmatpush1.msra.mxu0 0.0
    %81 = vmatprep.subr.mxu0 0.0
    %82 = vmatpush1.msra.mxu0 0.0
    %83 = vmatprep.subr.mxu0 0.0
    %84 = vmatpush1.msra.mxu0 0.0
    %85 = vmatprep.subr.mxu0 0.0
    %86 = vmatpush1.msra.mxu0 0.0
    %87 = vmatprep.subr.mxu0 0.0
    %88 = vmatpush1.msra.mxu0 0.0
    %89 = vmatprep.subr.mxu0 0.0
    %90 = vmatpush1.msra.mxu0 0.0
    %91 = vmatprep.subr.mxu0 0.0
    %92 = vmatpush1.msra.mxu0 0.0
    %93 = vmatprep.subr.mxu0 0.0
    %94 = vmatpush1.msra.mxu0 0.0
    %95 = vmatprep.subr.mxu0 0.0
    %96 = vmatpush1.msra.mxu0 0.0
    %97 = vmatprep.subr.mxu0 0.0
    %98 = vmatpush1.msra.mxu0 0.0
    %99 = vmatprep.subr.mxu0 0.0
    %100 = vmatpush1.msra.mxu0 0.0
    %101 = vmatprep.subr.mxu0 0.0
    %102 = vmatpush1.msra.mxu0 0.0
    %103 = vmatprep.subr.mxu0 0.0
    %104 = vmatpush1.msra.mxu0 0.0
    %105 = vmatprep.subr.mxu0 0.0
    %106 = vmatpush1.msra.mxu0 0.0
    %107 = vmatprep.subr.mxu0 0.0
    %108 = vmatpush1.msra.mxu0 0.0
    %109 = vmatprep.subr.mxu0 0.0
    %110 = vmatpush1.msra.mxu0 0.0
    %111 = vmatprep.subr.mxu0 0.0
    %112 = vmatpush1.msra.mxu0 0.0
    %113 = vmatprep.subr.mxu0 0.0
    %114 = vmatpush1.msra.mxu0 0.0
    %115 = vmatprep.mubr.f32.mxu0 0.0
    %116 = vmatmul.mubr.f32.gmra.mrb[0].mxu0 %v44
    %v117 = vpop.f32.mrb[0].mxu0
    %v118 = vadd.f32 0.0, %v117
    %v119 = vpop.f32.mrb[0].mxu0
    %v120 = vadd.f32 0.0, %v119
    %121 = vdwg.mxu0
    %v124 = vcombine.low %v118, %v120
    %126 = vst [vmem:[#allocation7] sm:$0xff] %v124
    %s127 = scalar_lea.vmem [#allocation2], 8
    %v128 = vld [vmem:[%s127] sm:$0xff]
    %v130 = vcombine.high %v128, %v128
    %v131 = vsel %vm46, %v128, 0
    %v133 = vsel %vm46, %v130, 0
    %135 = vmatprep.subr.mxu0 %v133
    %136 = vmatpush1.msra.mxu0 %v131
    %137 = vmatprep.subr.mxu0 0.0
    %138 = vmatpush1.msra.mxu0 0.0
    %139 = vmatprep.subr.mxu0 0.0
    %140 = vmatpush1.msra.mxu0 0.0
    %141 = vmatprep.subr.mxu0 0.0
    %142 = vmatpush1.msra.mxu0 0.0
    %143 = vmatprep.subr.mxu0 0.0
    %144 = vmatpush1.msra.mxu0 0.0
    %145 = vmatprep.subr.mxu0 0.0
    %146 = vmatpush1.msra.mxu0 0.0
    %147 = vmatprep.subr.mxu0 0.0
    %148 = vmatpush1.msra.mxu0 0.0
    %149 = vmatprep.subr.mxu0 0.0
    %150 = vmatpush1.msra.mxu0 0.0
    %151 = vmatprep.subr.mxu0 0.0
    %152 = vmatpush1.msra.mxu0 0.0
    %153 = vmatprep.subr.mxu0 0.0
    %154 = vmatpush1.msra.mxu0 0.0
    %155 = vmatprep.subr.mxu0 0.0
    %156 = vmatpush1.msra.mxu0 0.0
    %157 = vmatprep.subr.mxu0 0.0
    %158 = vmatpush1.msra.mxu0 0.0
    %159 = vmatprep.subr.mxu0 0.0
    %160 = vmatpush1.msra.mxu0 0.0
    %161 = vmatprep.subr.mxu0 0.0
    %162 = vmatpush1.msra.mxu0 0.0
    %163 = vmatprep.subr.mxu0 0.0
    %164 = vmatpush1.msra.mxu0 0.0
    %165 = vmatprep.subr.mxu0 0.0
    %166 = vmatpush1.msra.mxu0 0.0
    %167 = vmatprep.subr.mxu0 0.0
    %168 = vmatpush1.msra.mxu0 0.0
    %169 = vmatprep.subr.mxu0 0.0
    %170 = vmatpush1.msra.mxu0 0.0
    %171 = vmatprep.subr.mxu0 0.0
    %172 = vmatpush1.msra.mxu0 0.0
    %173 = vmatprep.subr.mxu0 0.0
    %174 = vmatpush1.msra.mxu0 0.0
    %175 = vmatprep.subr.mxu0 0.0
    %176 = vmatpush1.msra.mxu0 0.0
    %177 = vmatprep.subr.mxu0 0.0
    %178 = vmatpush1.msra.mxu0 0.0
    %179 = vmatprep.subr.mxu0 0.0
    %180 = vmatpush1.msra.mxu0 0.0
    %181 = vmatprep.subr.mxu0 0.0
    %182 = vmatpush1.msra.mxu0 0.0
    %183 = vmatprep.subr.mxu0 0.0
    %184 = vmatpush1.msra.mxu0 0.0
    %185 = vmatprep.subr.mxu0 0.0
    %186 = vmatpush1.msra.mxu0 0.0
    %187 = vmatprep.subr.mxu0 0.0
    %188 = vmatpush1.msra.mxu0 0.0
    %189 = vmatprep.subr.mxu0 0.0
    %190 = vmatpush1.msra.mxu0 0.0
    %191 = vmatprep.subr.mxu0 0.0
    %192 = vmatpush1.msra.mxu0 0.0
    %193 = vmatprep.subr.mxu0 0.0
    %194 = vmatpush1.msra.mxu0 0.0
    %195 = vmatprep.subr.mxu0 0.0
    %196 = vmatpush1.msra.mxu0 0.0
    %197 = vmatprep.subr.mxu0 0.0
    %198 = vmatpush1.msra.mxu0 0.0
    %199 = vmatprep.mubr.f32.mxu0 0.0
    %200 = vmatmul.mubr.f32.gmra.mrb[0].mxu0 %v44
    %v201 = vpop.f32.mrb[0].mxu0
    %v202 = vadd.f32 0.0, %v201
    %v203 = vpop.f32.mrb[0].mxu0
    %v204 = vadd.f32 0.0, %v203
    %205 = vdwg.mxu0
    %v208 = vcombine.low %v202, %v204
    %s210 = scalar_lea.vmem [#allocation7], 8
    %211 = vst [vmem:[%s210] sm:$0xff] %v208
    // Predicated region
    $region18: #{tpu_custom_call.1} parent=1 // pred_check
      _
    $region19: #{tpu_custom_call.1} parent=1 // pred_check_branch
      %213 = sbr.rel (0) target = $region21
    $region20: #{tpu_custom_call.1} parent=1 // pred_region
      %s215 = ssub.s32 256, 256
      %216 = vsyncadd [#allocation4], %s215
      %s217 = sshll.u32 [#allocation7], 4
      %s218 = int_to_ptr.vmem [resolvable:$true] %s217
      %223 = dma.vmem_to_hbm [thread:$0]  %s218, 256, %s2, [#allocation4], 128, 128, 8
    $region21: #{tpu_custom_call.1} parent=1 // pred_fallthru
      _
    // Predicated region
    $region22: #{tpu_custom_call.1} parent=1 // pred_check
      _
    $region23: #{tpu_custom_call.1} parent=1 // pred_check_branch
      %225 = sbr.rel (0) target = $region25
    $region24: #{tpu_custom_call.1} parent=1 // pred_region
      %226 = dma.done [#allocation4], 256
    $region25: #{tpu_custom_call.1} parent=1 // pred_fallthru
      _
    %227 = vsyncpa [#allocation3], 1
    %228 = vsyncpa [#allocation6], 1
    %229 = vsyncpa [#allocation4], 1

</llo_original>
